<compile_context>
chip_gen: v7x
topology: tpu7x:2x2x1
jax: 0.10.0
libtpu: 0.0.40
codegen_flags: <defaults>
</compile_context>

<pallas_src>
import math

import jax
import jax.numpy as jnp
import numpy as np
from jax.experimental import pallas as pl
from jax.experimental.pallas import tpu as pltpu


def _round_up(x, m):
    return ((x + m - 1) // m) * m


def _vmem_budget_bytes():
    """Double-buffered block-footprint budget, per TPU generation.

    v5e/v6e have 128 MiB of physical VMEM per TensorCore -> spend ~48 MiB on
    pipelined blocks (their scoped defaults are only 16/32 MiB, so
    vmem_limit_bytes is raised accordingly).  v7x has only 64 MiB -> cap at
    ~24 MiB so tiling derived for the big-VMEM chips does not OOM the smaller
    one.
    """
    cap = 64 << 20  # conservative (v7x-sized) default if the query fails
    try:
        info = pltpu.get_tpu_info()
        cap = int(getattr(info, "vmem_capacity_bytes", cap))
    except Exception:
        pass
    return (48 << 20) if cap >= (100 << 20) else (24 << 20)


def _decoder_f_kernel(f_ref, s_ref, o_ref):
    # One dense MXU pass builds the whole zero-padded tile: out = f @ S, where
    # S is a static 0/1 scatter matrix (block-diagonal over the G folded
    # groups).  This replaces the per-(group, index) 2-lane masked stores of
    # the previous version with a single unmasked, full-lane-width store
    # stream, so the kernel is HBM-write-bound again instead of vst/XLU-bound.
    o_ref[...] = jnp.dot(
        f_ref[...], s_ref[...], preferred_element_type=jnp.float32
    ).astype(o_ref.dtype)


def _build_scatter_matrix(nonzero_nodes_index, num_nodes, G, dtype):
    """Static one-hot scatter matrix of shape (G*2K, G*2*num_nodes)."""
    K = len(nonzero_nodes_index)
    last, out_cols = 2 * K, 2 * num_nodes
    # Duplicate indices: torch's sequential assignment is last-write-wins; a
    # one-hot matmul would SUM duplicated columns, so keep only the last
    # source column per destination node.
    last_src = {}
    for j, n in enumerate(nonzero_nodes_index):
        last_src[int(n)] = j
    s = np.zeros((G * last, G * out_cols), dtype=np.float32)
    for g in range(G):
        for n, j in last_src.items():
            for c in range(2):
                s[g * last + 2 * j + c, g * out_cols + 2 * n + c] = 1.0
    return jnp.asarray(s, dtype=dtype)  # 0/1 exact in any float dtype


def _decoder_f_reference(f_lat, nonzero_nodes_index=(9,), num_nodes=10,
                         out_dtype=jnp.float32):
    """Pure-JAX reference mirroring the PyTorch forward (torch.zeros -> f32)."""
    old_shape = f_lat.shape[:-1] + (f_lat.shape[-1] // 2, 2)
    new_shape = f_lat.shape[:-1] + (num_nodes, 2)
    f = jnp.zeros(new_shape, out_dtype)
    idx = jnp.asarray(nonzero_nodes_index)
    return f.at[..., idx, :].set(f_lat.reshape(old_shape).astype(out_dtype))


def decoder_f(f_lat, nonzero_nodes_index=(9,), num_nodes=10, *,
              out_dtype=jnp.float32, force_kernel=False):
    """Pallas equivalent of DecoderF.forward.

    Note: f32 inputs ride through the MXU one-hot matmul (values may see a
    bf16-pass mantissa truncation on some generations); bf16 inputs are copied
    exactly.  Non-finite inputs would also produce 0*inf artifacts in the
    zero-padded positions.
    """
    nonzero_nodes_index = tuple(int(i) for i in nonzero_nodes_index)
    lead = f_lat.shape[:-1]
    last = int(f_lat.shape[-1])
    K = last // 2
    if last != 2 * K or K != len(nonzero_nodes_index):
        raise ValueError("last dim must be 2 * len(nonzero_nodes_index)")
    if max(nonzero_nodes_index) >= num_nodes or min(nonzero_nodes_index) < 0:
        raise ValueError("nonzero_nodes_index out of range")
    out_cols = 2 * num_nodes
    out_dtype = jnp.dtype(out_dtype)
    in_dtype = f_lat.dtype

    B = int(math.prod(lead)) if lead else 1

    # Tiny problems: below ~1 MiB of output the fixed pallas_call dispatch and
    # grid prologue/epilogue dominate; let XLA fuse the pad/scatter instead.
    if not force_kernel and B * out_cols * out_dtype.itemsize < (1 << 20):
        return _decoder_f_reference(f_lat, nonzero_nodes_index, num_nodes,
                                    out_dtype)

    # Fold factor G: G consecutive batch rows per kernel row so the output
    # lane width (G*out_cols) is a multiple of 128 (unmasked vst, contiguous
    # writeback DMA).  Scale G further so the INPUT lane width (G*last) is
    # also a multiple of 128 — unless that would force batch padding that the
    # minimal fold avoids.  The fold/unfold reshapes are row-major no-ops.
    g_out = math.lcm(out_cols, 128) // out_cols
    g_full = g_out * (128 // math.gcd(g_out * last, 128))
    G = g_full if (B % g_full == 0 or B % g_out != 0) else g_out

    f2d = f_lat.reshape(B, last)

    # Common path: B folds exactly -> no input pad, no output slice copy.
    # Ragged batches pad the (small) input and slice the output once.
    # TODO(synk): mask the tail rows in-kernel so the ragged path also skips
    # the post-kernel output slice (a full extra HBM read+write of the output).
    B_pad = _round_up(B, G)
    if B_pad != B:
        f2d = jnp.pad(f2d, ((0, B_pad - B), (0, 0)))
    Bf = B_pad // G
    f_folded = f2d.reshape(Bf, G * last)

    s_mat = _build_scatter_matrix(nonzero_nodes_index, num_nodes, G, in_dtype)

    # ---- per-generation block sizing (rows of the folded view per block) ---
    in_item = jnp.dtype(in_dtype).itemsize
    out_item = out_dtype.itemsize
    s_bytes = s_mat.size * in_item
    in_row = G * last * in_item
    out_row = G * out_cols * out_item
    budget = _vmem_budget_bytes()
    # footprint ~= 2*(in_block + out_block) [double buffered] + S (resident).
    r_budget = max(8, ((budget - s_bytes) // (2 * (in_row + out_row))) // 8 * 8)

    if Bf <= 8 or (Bf % 8 != 0 and Bf <= r_budget):
        R = Bf                                  # single block == full fold dim
    else:
        R = min(r_budget, Bf if Bf % 8 == 0 else (Bf // 8) * 8)
        # Aim for >=4 grid steps (software pipelining on 1-TC v5e/v6e, >=2
        # steps per TensorCore on v7x's 2-TC megacore) while keeping blocks
        # >= ~1 MiB of output so per-step overhead stays amortized.
        if pl.cdiv(Bf, R) < 4:
            min_rows = max(8, ((1 << 20) // out_row) // 8 * 8)
            R = max(8, min(R, max(min_rows, _round_up(pl.cdiv(Bf, 4), 8))))
    grid = (pl.cdiv(Bf, R),)

    vmem_limit = int(min(budget + (16 << 20), 96 << 20))

    out_folded = pl.pallas_call(
        _decoder_f_kernel,
        out_shape=jax.ShapeDtypeStruct((Bf, G * out_cols), out_dtype),
        grid=grid,
        in_specs=[
            pl.BlockSpec((R, G * last), lambda i: (i, 0)),
            pl.BlockSpec((G * last, G * out_cols), lambda i: (0, 0)),
        ],
        out_specs=pl.BlockSpec((R, G * out_cols), lambda i: (i, 0)),
        compiler_params=pltpu.CompilerParams(
            dimension_semantics=("parallel",),
            vmem_limit_bytes=vmem_limit),
    )(f_folded, s_mat)

    out2d = out_folded.reshape(B_pad, out_cols)
    if B_pad != B:
        out2d = out2d[:B]
    return out2d.reshape(*lead, num_nodes, 2)


if __name__ == "__main__":
    key = jax.random.PRNGKey(0)
    k1, k2, k3 = jax.random.split(key, 3)

    # Case 1: DecoderF defaults (nonzero_nodes_index=[9], num_nodes=10), f32
    # input; batch*seq folds exactly -> no pad, no output slice copy.
    nz1, n1 = (9,), 10
    f1 = jax.random.normal(k1, (2, 256, 2 * len(nz1)), dtype=jnp.float32)
    out1 = jax.block_until_ready(decoder_f(f1, nz1, n1, force_kernel=True))
    ref1 = _decoder_f_reference(f1, nz1, n1)
    assert out1.shape == (2, 256, n1, 2) and out1.dtype == jnp.float32
    # f32 values go through the MXU one-hot matmul; tolerate a possible
    # bf16-pass mantissa truncation, and require exact zeros elsewhere.
    assert jnp.allclose(out1, ref1, rtol=1e-2, atol=1e-6), "case 1 mismatch"
    zero_mask = jnp.ones((n1,), bool).at[jnp.asarray(nz1)].set(False)
    assert bool(jnp.all(out1[..., zero_mask, :] == 0.0)), "case 1 padding"

    # Case 2: bf16 input, multiple nonzero nodes -> exact copies (bf16 x 0/1
    # accumulated in f32 is exact), f32 output (torch.zeros default dtype).
    nz2, n2 = (1, 4, 9), 10
    f2 = jax.random.normal(k2, (8, 512, 2 * len(nz2)), dtype=jnp.bfloat16)
    out2 = jax.block_until_ready(decoder_f(f2, nz2, n2, force_kernel=True))
    ref2 = _decoder_f_reference(f2, nz2, n2)
    assert out2.shape == (8, 512, n2, 2) and out2.dtype == jnp.float32
    assert jnp.array_equal(out2, ref2), "case 2 mismatch"

    # Case 3: batch not divisible by the fold factor -> padded + sliced path.
    nz3, n3 = (0, 7), 12
    f3 = jax.random.normal(k3, (3, 200, 2 * len(nz3)), dtype=jnp.bfloat16)
    out3 = jax.block_until_ready(decoder_f(f3, nz3, n3, force_kernel=True))
    ref3 = _decoder_f_reference(f3, nz3, n3)
    assert out3.shape == (3, 200, n3, 2)
    assert jnp.array_equal(out3, ref3), "case 3 mismatch"

    print("KERNEL_OK")
</pallas_src>

<mosaic_0001>
module attributes {stable_mosaic.version = 11 : i64} {
  func.func @_decoder_f_kernel(%arg0: i32, %arg1: memref<8x128xf32, #tpu.memory_space<vmem>>, %arg2: memref<128x1280xf32, #tpu.memory_space<vmem>>, %arg3: memref<8x1280xf32, #tpu.memory_space<vmem>>) attributes {dimension_semantics = [#tpu.dimension_semantics<parallel>], iteration_bounds = array<i64: 1>, scalar_prefetch = 0 : i64, scratch_operands = 0 : i64, tpu.core_type = #tpu.core_type<tc>, window_params = [{transform_indices = @transform_0, window_bounds = array<i64: 8, 128>}, {pipeline_mode = #tpu.pipeline_mode<synchronous>, transform_indices = @transform_1, window_bounds = array<i64: 128, 1280>}, {transform_indices = @transform_2, window_bounds = array<i64: 8, 1280>}]} {
    %c0 = arith.constant 0 : index
    %c0_0 = arith.constant 0 : index
    %0 = vector.load %arg1[%c0, %c0_0] : memref<8x128xf32, #tpu.memory_space<vmem>>, vector<8x128xf32>
    %c0_1 = arith.constant 0 : index
    %c0_2 = arith.constant 0 : index
    %1 = vector.load %arg2[%c0_1, %c0_2] : memref<128x1280xf32, #tpu.memory_space<vmem>>, vector<128x1280xf32>
    %cst = arith.constant dense<0.000000e+00> : vector<8x1280xf32>
    %2 = tpu.matmul %0, %1, %cst {dimension_numbers = #tpu.dot_dimension_numbers<[1], [0], [0], [1], [0, 0, 1, 1], [], []>} : vector<8x128xf32>, vector<128x1280xf32>, vector<8x1280xf32> -> vector<8x1280xf32>
    %c0_3 = arith.constant 0 : index
    %c0_4 = arith.constant 0 : index
    %3 = vector.load %arg3[%c0_3, %c0_4] : memref<8x1280xf32, #tpu.memory_space<vmem>>, vector<8x1280xf32>
    tpu.vector_store %arg3[%c0_3, %c0_4], %2 {strides = array<i32>} : memref<8x1280xf32, #tpu.memory_space<vmem>>, vector<8x1280xf32>,
    return
  }
  func.func @transform_0(%arg0: i32) -> (i32, i32) {
    %c0_i32 = arith.constant 0 : i32
    %c0_i32_0 = arith.constant 0 : i32
    return %arg0, %c0_i32 : i32, i32
  }
  func.func @transform_1(%arg0: i32) -> (i32, i32) {
    %c0_i32 = arith.constant 0 : i32
    %c0_i32_0 = arith.constant 0 : i32
    %c0_i32_1 = arith.constant 0 : i32
    return %c0_i32, %c0_i32_0 : i32, i32
  }
  func.func @transform_2(%arg0: i32) -> (i32, i32) {
    %c0_i32 = arith.constant 0 : i32
    %c0_i32_0 = arith.constant 0 : i32
    return %arg0, %c0_i32 : i32, i32
  }
}

</mosaic_0001>

<llo_original>
// kernel: tpu_custom_call.1
$region0: #{tpu_custom_call.1}
  #allocation0 [shape = 'u32[]', space=smem, size = 0x4, offset = 0x4, fixed_abs, tag = 'smem constant byte address 0x4 - core index']
  #allocation1 [shape = 'u32[144,128]{1,0:T(1,128)}', space=vmem, size = 0x12000, scoped, tag = 'internal scratch']
  %s0 = inlined_call_operand.hbm [shape: f32[8,128], index: 0, kind: input, shape index: {}]
  %s1 = inlined_call_operand.hbm [shape: f32[128,1280], index: 1, kind: input, shape index: {}]
  %s2 = inlined_call_operand.hbm [shape: f32[8,1280], index: 2, kind: output, shape index: {}]
  %s3 = sld [smem:[#allocation0]]
  $region26: #{tpu_custom_call.1} parent=0
    _
  %s5 = ssub.s32 1, %s3
  %s6 = scalar_select 0, %s5, %s3
  $region1: #{tpu_custom_call.1} parent=0
    #allocation2 [shape = 'u8[4096]{0}', space=vmem, size = 0x1000, scoped, tag = 'input window, operand 0, single buffered']
    #allocation3 [shape = 's32[1]{0}', space=sflag, size = 0x4, scoped, tag = 'scoped memory for tpu_custom_call.1']
    #allocation4 [shape = 's32[1]{0}', space=sflag, size = 0x4, scoped, tag = 'scoped memory for tpu_custom_call.1']
    #allocation5 [shape = 'u8[655360]{0}', space=vmem, size = 0xa0000, scoped, tag = 'input window, operand 1, single buffered']
    #allocation6 [shape = 's32[1]{0}', space=sflag, size = 0x4, scoped, tag = 'scoped memory for tpu_custom_call.1']
    #allocation7 [shape = 'u8[40960]{0}', space=vmem, size = 0xa000, scoped, tag = 'output window, operand 0, single buffered']
    %7 = vsyncpa [#allocation3], 0
    %8 = vsyncpa [#allocation6], 0
    %9 = vsyncpa [#allocation4], 0
    // Predicated region
    $region2: #{tpu_custom_call.1} parent=1 // pred_check
      _
    $region3: #{tpu_custom_call.1} parent=1 // pred_check_branch
      %11 = sbr.rel (0) target = $region5
    $region4: #{tpu_custom_call.1} parent=1 // pred_region
      %s13 = ssub.s32 128, 128
      %14 = vsyncadd [#allocation3], %s13
      %s16 = sshll.u32 [#allocation2], 4
      %s17 = int_to_ptr.vmem [resolvable:$true] %s16
      %19 = dma.hbm_to_vmem [thread:$0]  %s0, 128, %s17, [#allocation3]
    $region5: #{tpu_custom_call.1} parent=1 // pred_fallthru
      _
    // Predicated region
    $region6: #{tpu_custom_call.1} parent=1 // pred_check
      _
    $region7: #{tpu_custom_call.1} parent=1 // pred_check_branch
      %21 = sbr.rel (0) target = $region9
    $region8: #{tpu_custom_call.1} parent=1 // pred_region
      %s23 = ssub.s32 20480, 20480
      %24 = vsyncadd [#allocation6], %s23
      %s25 = sshll.u32 [#allocation5], 4
      %s26 = int_to_ptr.vmem [resolvable:$true] %s25
      %31 = dma.hbm_to_vmem [thread:$0]  %s1, 20480, %s26, [#allocation6], 1280, 1280, 80
    $region9: #{tpu_custom_call.1} parent=1 // pred_fallthru
      _
    // Predicated region
    $region10: #{tpu_custom_call.1} parent=1 // pred_check
      _
    $region11: #{tpu_custom_call.1} parent=1 // pred_check_branch
      %33 = sbr.rel (0) target = $region13
    $region12: #{tpu_custom_call.1} parent=1 // pred_region
      %34 = dma.done [#allocation3], 128
    $region13: #{tpu_custom_call.1} parent=1 // pred_fallthru
      _
    // Predicated region
    $region14: #{tpu_custom_call.1} parent=1 // pred_check
      _
    $region15: #{tpu_custom_call.1} parent=1 // pred_check_branch
      %36 = sbr.rel (0) target = $region17
    $region16: #{tpu_custom_call.1} parent=1 // pred_region
      %37 = dma.done [#allocation6], 20480
    $region17: #{tpu_custom_call.1} parent=1 // pred_fallthru
      _
    %v38 = vld [vmem:[#allocation2] sm:$0xff]
    %v39 = vld [vmem:[#allocation5] sm:$0xff]
    %v40 = vld [vmem:[#allocation5 + $0x8] sm:$0xff]
    %v41 = vld [vmem:[#allocation5 + $0x10] sm:$0xff]
    %v42 = vld [vmem:[#allocation5 + $0x18] sm:$0xff]
    %v43 = vld [vmem:[#allocation5 + $0x20] sm:$0xff]
    %v44 = vld [vmem:[#allocation5 + $0x28] sm:$0xff]
    %v45 = vld [vmem:[#allocation5 + $0x30] sm:$0xff]
    %v46 = vld [vmem:[#allocation5 + $0x38] sm:$0xff]
    %v47 = vld [vmem:[#allocation5 + $0x40] sm:$0xff]
    %v48 = vld [vmem:[#allocation5 + $0x48] sm:$0xff]
    %v49 = vld [vmem:[#allocation5 + $0x50] sm:$0xff]
    %v50 = vld [vmem:[#allocation5 + $0x58] sm:$0xff]
    %v51 = vld [vmem:[#allocation5 + $0x60] sm:$0xff]
    %v52 = vld [vmem:[#allocation5 + $0x68] sm:$0xff]
    %v53 = vld [vmem:[#allocation5 + $0x70] sm:$0xff]
    %v54 = vld [vmem:[#allocation5 + $0x78] sm:$0xff]
    %v55 = vld [vmem:[#allocation5 + $0x80] sm:$0xff]
    %v56 = vld [vmem:[#allocation5 + $0x88] sm:$0xff]
    %v57 = vld [vmem:[#allocation5 + $0x90] sm:$0xff]
    %v58 = vld [vmem:[#allocation5 + $0x98] sm:$0xff]
    %v59 = vld [vmem:[#allocation5 + $0xa0] sm:$0xff]
    %v60 = vld [vmem:[#allocation5 + $0xa8] sm:$0xff]
    %v61 = vld [vmem:[#allocation5 + $0xb0] sm:$0xff]
    %v62 = vld [vmem:[#allocation5 + $0xb8] sm:$0xff]
    %v63 = vld [vmem:[#allocation5 + $0xc0] sm:$0xff]
    %v64 = vld [vmem:[#allocation5 + $0xc8] sm:$0xff]
    %v65 = vld [vmem:[#allocation5 + $0xd0] sm:$0xff]
    %v66 = vld [vmem:[#allocation5 + $0xd8] sm:$0xff]
    %v67 = vld [vmem:[#allocation5 + $0xe0] sm:$0xff]
    %v68 = vld [vmem:[#allocation5 + $0xe8] sm:$0xff]
    %v69 = vld [vmem:[#allocation5 + $0xf0] sm:$0xff]
    %v70 = vld [vmem:[#allocation5 + $0xf8] sm:$0xff]
    %v71 = vld [vmem:[#allocation5 + $0x100] sm:$0xff]
    %v72 = vld [vmem:[#allocation5 + $0x108] sm:$0xff]
    %v73 = vld [vmem:[#allocation5 + $0x110] sm:$0xff]
    %v74 = vld [vmem:[#allocation5 + $0x118] sm:$0xff]
    %v75 = vld [vmem:[#allocation5 + $0x120] sm:$0xff]
    %v76 = vld [vmem:[#allocation5 + $0x128] sm:$0xff]
    %v77 = vld [vmem:[#allocation5 + $0x130] sm:$0xff]
    %v78 = vld [vmem:[#allocation5 + $0x138] sm:$0xff]
    %v79 = vld [vmem:[#allocation5 + $0x140] sm:$0xff]
    %v80 = vld [vmem:[#allocation5 + $0x148] sm:$0xff]
    %v81 = vld [vmem:[#allocation5 + $0x150] sm:$0xff]
    %v82 = vld [vmem:[#allocation5 + $0x158] sm:$0xff]
    %v83 = vld [vmem:[#allocation5 + $0x160] sm:$0xff]
    %v84 = vld [vmem:[#allocation5 + $0x168] sm:$0xff]
    %v85 = vld [vmem:[#allocation5 + $0x170] sm:$0xff]
    %v86 = vld [vmem:[#allocation5 + $0x178] sm:$0xff]
    %v87 = vld [vmem:[#allocation5 + $0x180] sm:$0xff]
    %v88 = vld [vmem:[#allocation5 + $0x188] sm:$0xff]
    %v89 = vld [vmem:[#allocation5 + $0x190] sm:$0xff]
    %v90 = vld [vmem:[#allocation5 + $0x198] sm:$0xff]
    %v91 = vld [vmem:[#allocation5 + $0x1a0] sm:$0xff]
    %v92 = vld [vmem:[#allocation5 + $0x1a8] sm:$0xff]
    %v93 = vld [vmem:[#allocation5 + $0x1b0] sm:$0xff]
    %v94 = vld [vmem:[#allocation5 + $0x1b8] sm:$0xff]
    %v95 = vld [vmem:[#allocation5 + $0x1c0] sm:$0xff]
    %v96 = vld [vmem:[#allocation5 + $0x1c8] sm:$0xff]
    %v97 = vld [vmem:[#allocation5 + $0x1d0] sm:$0xff]
    %v98 = vld [vmem:[#allocation5 + $0x1d8] sm:$0xff]
    %v99 = vld [vmem:[#allocation5 + $0x1e0] sm:$0xff]
    %v100 = vld [vmem:[#allocation5 + $0x1e8] sm:$0xff]
    %v101 = vld [vmem:[#allocation5 + $0x1f0] sm:$0xff]
    %v102 = vld [vmem:[#allocation5 + $0x1f8] sm:$0xff]
    %v103 = vld [vmem:[#allocation5 + $0x200] sm:$0xff]
    %v104 = vld [vmem:[#allocation5 + $0x208] sm:$0xff]
    %v105 = vld [vmem:[#allocation5 + $0x210] sm:$0xff]
    %v106 = vld [vmem:[#allocation5 + $0x218] sm:$0xff]
    %v107 = vld [vmem:[#allocation5 + $0x220] sm:$0xff]
    %v108 = vld [vmem:[#allocation5 + $0x228] sm:$0xff]
    %v109 = vld [vmem:[#allocation5 + $0x230] sm:$0xff]
    %v110 = vld [vmem:[#allocation5 + $0x238] sm:$0xff]
    %v111 = vld [vmem:[#allocation5 + $0x240] sm:$0xff]
    %v112 = vld [vmem:[#allocation5 + $0x248] sm:$0xff]
    %v113 = vld [vmem:[#allocation5 + $0x250] sm:$0xff]
    %v114 = vld [vmem:[#allocation5 + $0x258] sm:$0xff]
    %v115 = vld [vmem:[#allocation5 + $0x260] sm:$0xff]
    %v116 = vld [vmem:[#allocation5 + $0x268] sm:$0xff]
    %v117 = vld [vmem:[#allocation5 + $0x270] sm:$0xff]
    %v118 = vld [vmem:[#allocation5 + $0x278] sm:$0xff]
    %v119 = vld [vmem:[#allocation5 + $0x280] sm:$0xff]
    %v120 = vld [vmem:[#allocation5 + $0x288] sm:$0xff]
    %v121 = vld [vmem:[#allocation5 + $0x290] sm:$0xff]
    %v122 = vld [vmem:[#allocation5 + $0x298] sm:$0xff]
    %v123 = vld [vmem:[#allocation5 + $0x2a0] sm:$0xff]
    %v124 = vld [vmem:[#allocation5 + $0x2a8] sm:$0xff]
    %v125 = vld [vmem:[#allocation5 + $0x2b0] sm:$0xff]
    %v126 = vld [vmem:[#allocation5 + $0x2b8] sm:$0xff]
    %v127 = vld [vmem:[#allocation5 + $0x2c0] sm:$0xff]
    %v128 = vld [vmem:[#allocation5 + $0x2c8] sm:$0xff]
    %v129 = vld [vmem:[#allocation5 + $0x2d0] sm:$0xff]
    %v130 = vld [vmem:[#allocation5 + $0x2d8] sm:$0xff]
    %v131 = vld [vmem:[#allocation5 + $0x2e0] sm:$0xff]
    %v132 = vld [vmem:[#allocation5 + $0x2e8] sm:$0xff]
    %v133 = vld [vmem:[#allocation5 + $0x2f0] sm:$0xff]
    %v134 = vld [vmem:[#allocation5 + $0x2f8] sm:$0xff]
    %v135 = vld [vmem:[#allocation5 + $0x300] sm:$0xff]
    %v136 = vld [vmem:[#allocation5 + $0x308] sm:$0xff]
    %v137 = vld [vmem:[#allocation5 + $0x310] sm:$0xff]
    %v138 = vld [vmem:[#allocation5 + $0x318] sm:$0xff]
    %v139 = vld [vmem:[#allocation5 + $0x320] sm:$0xff]
    %v140 = vld [vmem:[#allocation5 + $0x328] sm:$0xff]
    %v141 = vld [vmem:[#allocation5 + $0x330] sm:$0xff]
    %v142 = vld [vmem:[#allocation5 + $0x338] sm:$0xff]
    %v143 = vld [vmem:[#allocation5 + $0x340] sm:$0xff]
    %v144 = vld [vmem:[#allocation5 + $0x348] sm:$0xff]
    %v145 = vld [vmem:[#allocation5 + $0x350] sm:$0xff]
    %v146 = vld [vmem:[#allocation5 + $0x358] sm:$0xff]
    %v147 = vld [vmem:[#allocation5 + $0x360] sm:$0xff]
    %v148 = vld [vmem:[#allocation5 + $0x368] sm:$0xff]
    %v149 = vld [vmem:[#allocation5 + $0x370] sm:$0xff]
    %v150 = vld [vmem:[#allocation5 + $0x378] sm:$0xff]
    %v151 = vld [vmem:[#allocation5 + $0x380] sm:$0xff]
    %v152 = vld [vmem:[#allocation5 + $0x388] sm:$0xff]
    %v153 = vld [vmem:[#allocation5 + $0x390] sm:$0xff]
    %v154 = vld [vmem:[#allocation5 + $0x398] sm:$0xff]
    %v155 = vld [vmem:[#allocation5 + $0x3a0] sm:$0xff]
    %v156 = vld [vmem:[#allocation5 + $0x3a8] sm:$0xff]
    %v157 = vld [vmem:[#allocation5 + $0x3b0] sm:$0xff]
    %v158 = vld [vmem:[#allocation5 + $0x3b8] sm:$0xff]
    %v159 = vld [vmem:[#allocation5 + $0x3c0] sm:$0xff]
    %v160 = vld [vmem:[#allocation5 + $0x3c8] sm:$0xff]
    %v161 = vld [vmem:[#allocation5 + $0x3d0] sm:$0xff]
    %v162 = vld [vmem:[#allocation5 + $0x3d8] sm:$0xff]
    %v163 = vld [vmem:[#allocation5 + $0x3e0] sm:$0xff]
    %v164 = vld [vmem:[#allocation5 + $0x3e8] sm:$0xff]
    %v165 = vld [vmem:[#allocation5 + $0x3f0] sm:$0xff]
    %v166 = vld [vmem:[#allocation5 + $0x3f8] sm:$0xff]
    %v167 = vld [vmem:[#allocation5 + $0x400] sm:$0xff]
    %v168 = vld [vmem:[#allocation5 + $0x408] sm:$0xff]
    %v169 = vld [vmem:[#allocation5 + $0x410] sm:$0xff]
    %v170 = vld [vmem:[#allocation5 + $0x418] sm:$0xff]
    %v171 = vld [vmem:[#allocation5 + $0x420] sm:$0xff]
    %v172 = vld [vmem:[#allocation5 + $0x428] sm:$0xff]
    %v173 = vld [vmem:[#allocation5 + $0x430] sm:$0xff]
    %v174 = vld [vmem:[#allocation5 + $0x438] sm:$0xff]
    %v175 = vld [vmem:[#allocation5 + $0x440] sm:$0xff]
    %v176 = vld [vmem:[#allocation5 + $0x448] sm:$0xff]
    %v177 = vld [vmem:[#allocation5 + $0x450] sm:$0xff]
    %v178 = vld [vmem:[#allocation5 + $0x458] sm:$0xff]
    %v179 = vld [vmem:[#allocation5 + $0x460] sm:$0xff]
    %v180 = vld [vmem:[#allocation5 + $0x468] sm:$0xff]
    %v181 = vld [vmem:[#allocation5 + $0x470] sm:$0xff]
    %v182 = vld [vmem:[#allocation5 + $0x478] sm:$0xff]
    %v183 = vld [vmem:[#allocation5 + $0x480] sm:$0xff]
    %v184 = vld [vmem:[#allocation5 + $0x488] sm:$0xff]
    %v185 = vld [vmem:[#allocation5 + $0x490] sm:$0xff]
    %v186 = vld [vmem:[#allocation5 + $0x498] sm:$0xff]
    %v187 = vld [vmem:[#allocation5 + $0x4a0] sm:$0xff]
    %v188 = vld [vmem:[#allocation5 + $0x4a8] sm:$0xff]
    %v189 = vld [vmem:[#allocation5 + $0x4b0] sm:$0xff]
    %v190 = vld [vmem:[#allocation5 + $0x4b8] sm:$0xff]
    %v191 = vld [vmem:[#allocation5 + $0x4c0] sm:$0xff]
    %v192 = vld [vmem:[#allocation5 + $0x4c8] sm:$0xff]
    %v193 = vld [vmem:[#allocation5 + $0x4d0] sm:$0xff]
    %v194 = vld [vmem:[#allocation5 + $0x4d8] sm:$0xff]
    %v195 = vld [vmem:[#allocation5 + $0x4e0] sm:$0xff]
    %v196 = vld [vmem:[#allocation5 + $0x4e8] sm:$0xff]
    %v197 = vld [vmem:[#allocation5 + $0x4f0] sm:$0xff]
    %v198 = vld [vmem:[#allocation5 + $0x4f8] sm:$0xff]
    %199 = vmatprep.subr.mxu0 %v40
    %200 = vmatpush1.msra.mxu0 %v39
    %201 = vmatprep.subr.mxu0 %v50
    %202 = vmatpush1.msra.mxu0 %v49
    %203 = vmatprep.subr.mxu0 %v60
    %204 = vmatpush1.msra.mxu0 %v59
    %205 = vmatprep.subr.mxu0 %v70
    %206 = vmatpush1.msra.mxu0 %v69
    %207 = vmatprep.subr.mxu0 %v80
    %208 = vmatpush1.msra.mxu0 %v79
    %209 = vmatprep.subr.mxu0 %v90
    %210 = vmatpush1.msra.mxu0 %v89
    %211 = vmatprep.subr.mxu0 %v100
    %212 = vmatpush1.msra.mxu0 %v99
    %213 = vmatprep.subr.mxu0 %v110
    %214 = vmatpush1.msra.mxu0 %v109
    %215 = vmatprep.subr.mxu0 %v120
    %216 = vmatpush1.msra.mxu0 %v119
    %217 = vmatprep.subr.mxu0 %v130
    %218 = vmatpush1.msra.mxu0 %v129
    %219 = vmatprep.subr.mxu0 %v140
    %220 = vmatpush1.msra.mxu0 %v139
    %221 = vmatprep.subr.mxu0 %v150
    %222 = vmatpush1.msra.mxu0 %v149
    %223 = vmatprep.subr.mxu0 %v160
    %224 = vmatpush1.msra.mxu0 %v159
    %225 = vmatprep.subr.mxu0 %v170
    %226 = vmatpush1.msra.mxu0 %v169
    %227 = vmatprep.subr.mxu0 %v180
    %228 = vmatpush1.msra.mxu0 %v179
    %229 = vmatprep.subr.mxu0 %v190
    %230 = vmatpush1.msra.mxu0 %v189
    %231 = vmatprep.subr.mxu0 0.0
    %232 = vmatpush1.msra.mxu0 0.0
    %233 = vmatprep.subr.mxu0 0.0
    %234 = vmatpush1.msra.mxu0 0.0
    %235 = vmatprep.subr.mxu0 0.0
    %236 = vmatpush1.msra.mxu0 0.0
    %237 = vmatprep.subr.mxu0 0.0
    %238 = vmatpush1.msra.mxu0 0.0
    %239 = vmatprep.subr.mxu0 0.0
    %240 = vmatpush1.msra.mxu0 0.0
    %241 = vmatprep.subr.mxu0 0.0
    %242 = vmatpush1.msra.mxu0 0.0
    %243 = vmatprep.subr.mxu0 0.0
    %244 = vmatpush1.msra.mxu0 0.0
    %245 = vmatprep.subr.mxu0 0.0
    %246 = vmatpush1.msra.mxu0 0.0
    %247 = vmatprep.subr.mxu0 0.0
    %248 = vmatpush1.msra.mxu0 0.0
    %249 = vmatprep.subr.mxu0 0.0
    %250 = vmatpush1.msra.mxu0 0.0
    %251 = vmatprep.subr.mxu0 0.0
    %252 = vmatpush1.msra.mxu0 0.0
    %253 = vmatprep.subr.mxu0 0.0
    %254 = vmatpush1.msra.mxu0 0.0
    %255 = vmatprep.subr.mxu0 0.0
    %256 = vmatpush1.msra.mxu0 0.0
    %257 = vmatprep.subr.mxu0 0.0
    %258 = vmatpush1.msra.mxu0 0.0
    %259 = vmatprep.subr.mxu0 0.0
    %260 = vmatpush1.msra.mxu0 0.0
    %261 = vmatprep.subr.mxu0 0.0
    %262 = vmatpush1.msra.mxu0 0.0
    %263 = vmatprep.mubr.f32.mxu0 0.0
    %264 = vmatmul.mubr.f32.gmra.mrb[0].mxu0 %v38
    %v265 = vpop.f32.mrb[0].mxu0
    %v266 = vadd.f32 0.0, %v265
    %v267 = vpop.f32.mrb[0].mxu0
    %v268 = vadd.f32 0.0, %v267
    %269 = vdwg.mxu0
    %270 = vmatprep.subr.mxu0 %v42
    %271 = vmatpush1.msra.mxu0 %v41
    %272 = vmatprep.subr.mxu0 %v52
    %273 = vmatpush1.msra.mxu0 %v51
    %274 = vmatprep.subr.mxu0 %v62
    %275 = vmatpush1.msra.mxu0 %v61
    %276 = vmatprep.subr.mxu0 %v72
    %277 = vmatpush1.msra.mxu0 %v71
    %278 = vmatprep.subr.mxu0 %v82
    %279 = vmatpush1.msra.mxu0 %v81
    %280 = vmatprep.subr.mxu0 %v92
    %281 = vmatpush1.msra.mxu0 %v91
    %282 = vmatprep.subr.mxu0 %v102
    %283 = vmatpush1.msra.mxu0 %v101
    %284 = vmatprep.subr.mxu0 %v112
    %285 = vmatpush1.msra.mxu0 %v111
    %286 = vmatprep.subr.mxu0 %v122
    %287 = vmatpush1.msra.mxu0 %v121
    %288 = vmatprep.subr.mxu0 %v132
    %289 = vmatpush1.msra.mxu0 %v131
    %290 = vmatprep.subr.mxu0 %v142
    %291 = vmatpush1.msra.mxu0 %v141
    %292 = vmatprep.subr.mxu0 %v152
    %293 = vmatpush1.msra.mxu0 %v151
    %294 = vmatprep.subr.mxu0 %v162
    %295 = vmatpush1.msra.mxu0 %v161
    %296 = vmatprep.subr.mxu0 %v172
    %297 = vmatpush1.msra.mxu0 %v171
    %298 = vmatprep.subr.mxu0 %v182
    %299 = vmatpush1.msra.mxu0 %v181
    %300 = vmatprep.subr.mxu0 %v192
    %301 = vmatpush1.msra.mxu0 %v191
    %302 = vmatprep.subr.mxu0 0.0
    %303 = vmatpush1.msra.mxu0 0.0
    %304 = vmatprep.subr.mxu0 0.0
    %305 = vmatpush1.msra.mxu0 0.0
    %306 = vmatprep.subr.mxu0 0.0
    %307 = vmatpush1.msra.mxu0 0.0
    %308 = vmatprep.subr.mxu0 0.0
    %309 = vmatpush1.msra.mxu0 0.0
    %310 = vmatprep.subr.mxu0 0.0
    %311 = vmatpush1.msra.mxu0 0.0
    %312 = vmatprep.subr.mxu0 0.0
    %313 = vmatpush1.msra.mxu0 0.0
    %314 = vmatprep.subr.mxu0 0.0
    %315 = vmatpush1.msra.mxu0 0.0
    %316 = vmatprep.subr.mxu0 0.0
    %317 = vmatpush1.msra.mxu0 0.0
    %318 = vmatprep.subr.mxu0 0.0
    %319 = vmatpush1.msra.mxu0 0.0
    %320 = vmatprep.subr.mxu0 0.0
    %321 = vmatpush1.msra.mxu0 0.0
    %322 = vmatprep.subr.mxu0 0.0
    %323 = vmatpush1.msra.mxu0 0.0
    %324 = vmatprep.subr.mxu0 0.0
    %325 = vmatpush1.msra.mxu0 0.0
    %326 = vmatprep.subr.mxu0 0.0
    %327 = vmatpush1.msra.mxu0 0.0
    %328 = vmatprep.subr.mxu0 0.0
    %329 = vmatpush1.msra.mxu0 0.0
    %330 = vmatprep.subr.mxu0 0.0
    %331 = vmatpush1.msra.mxu0 0.0
    %332 = vmatprep.subr.mxu0 0.0
    %333 = vmatpush1.msra.mxu0 0.0
    %334 = vmatprep.mubr.f32.mxu0 0.0
    %335 = vmatmul.mubr.f32.gmra.mrb[0].mxu0 %v38
    %v336 = vpop.f32.mrb[0].mxu0
    %v337 = vadd.f32 0.0, %v336
    %v338 = vpop.f32.mrb[0].mxu0
    %v339 = vadd.f32 0.0, %v338
    %340 = vdwg.mxu0
    %341 = vmatprep.subr.mxu0 %v44
    %342 = vmatpush1.msra.mxu0 %v43
    %343 = vmatprep.subr.mxu0 %v54
    %344 = vmatpush1.msra.mxu0 %v53
    %345 = vmatprep.subr.mxu0 %v64
    %346 = vmatpush1.msra.mxu0 %v63
    %347 = vmatprep.subr.mxu0 %v74
    %348 = vmatpush1.msra.mxu0 %v73
    %349 = vmatprep.subr.mxu0 %v84
    %350 = vmatpush1.msra.mxu0 %v83
    %351 = vmatprep.subr.mxu0 %v94
    %352 = vmatpush1.msra.mxu0 %v93
    %353 = vmatprep.subr.mxu0 %v104
    %354 = vmatpush1.msra.mxu0 %v103
    %355 = vmatprep.subr.mxu0 %v114
    %356 = vmatpush1.msra.mxu0 %v113
    %357 = vmatprep.subr.mxu0 %v124
    %358 = vmatpush1.msra.mxu0 %v123
    %359 = vmatprep.subr.mxu0 %v134
    %360 = vmatpush1.msra.mxu0 %v133
    %361 = vmatprep.subr.mxu0 %v144
    %362 = vmatpush1.msra.mxu0 %v143
    %363 = vmatprep.subr.mxu0 %v154
    %364 = vmatpush1.msra.mxu0 %v153
    %365 = vmatprep.subr.mxu0 %v164
    %366 = vmatpush1.msra.mxu0 %v163
    %367 = vmatprep.subr.mxu0 %v174
    %368 = vmatpush1.msra.mxu0 %v173
    %369 = vmatprep.subr.mxu0 %v184
    %370 = vmatpush1.msra.mxu0 %v183
    %371 = vmatprep.subr.mxu0 %v194
    %372 = vmatpush1.msra.mxu0 %v193
    %373 = vmatprep.subr.mxu0 0.0
    %374 = vmatpush1.msra.mxu0 0.0
    %375 = vmatprep.subr.mxu0 0.0
    %376 = vmatpush1.msra.mxu0 0.0
    %377 = vmatprep.subr.mxu0 0.0
    %378 = vmatpush1.msra.mxu0 0.0
    %379 = vmatprep.subr.mxu0 0.0
    %380 = vmatpush1.msra.mxu0 0.0
    %381 = vmatprep.subr.mxu0 0.0
    %382 = vmatpush1.msra.mxu0 0.0
    %383 = vmatprep.subr.mxu0 0.0
    %384 = vmatpush1.msra.mxu0 0.0
    %385 = vmatprep.subr.mxu0 0.0
    %386 = vmatpush1.msra.mxu0 0.0
    %387 = vmatprep.subr.mxu0 0.0
    %388 = vmatpush1.msra.mxu0 0.0
    %389 = vmatprep.subr.mxu0 0.0
    %390 = vmatpush1.msra.mxu0 0.0
    %391 = vmatprep.subr.mxu0 0.0
    %392 = vmatpush1.msra.mxu0 0.0
    %393 = vmatprep.subr.mxu0 0.0
    %394 = vmatpush1.msra.mxu0 0.0
    %395 = vmatprep.subr.mxu0 0.0
    %396 = vmatpush1.msra.mxu0 0.0
    %397 = vmatprep.subr.mxu0 0.0
    %398 = vmatpush1.msra.mxu0 0.0
    %399 = vmatprep.subr.mxu0 0.0
    %400 = vmatpush1.msra.mxu0 0.0
    %401 = vmatprep.subr.mxu0 0.0
    %402 = vmatpush1.msra.mxu0 0.0
    %403 = vmatprep.subr.mxu0 0.0
    %404 = vmatpush1.msra.mxu0 0.0
    %405 = vmatprep.mubr.f32.mxu0 0.0
    %406 = vmatmul.mubr.f32.gmra.mrb[0].mxu0 %v38
    %v407 = vpop.f32.mrb[0].mxu0
    %v408 = vadd.f32 0.0, %v407
    %v409 = vpop.f32.mrb[0].mxu0
    %v410 = vadd.f32 0.0, %v409
    %411 = vdwg.mxu0
    %412 = vmatprep.subr.mxu0 %v46
    %413 = vmatpush1.msra.mxu0 %v45
    %414 = vmatprep.subr.mxu0 %v56
    %415 = vmatpush1.msra.mxu0 %v55
    %416 = vmatprep.subr.mxu0 %v66
    %417 = vmatpush1.msra.mxu0 %v65
    %418 = vmatprep.subr.mxu0 %v76
    %419 = vmatpush1.msra.mxu0 %v75
    %420 = vmatprep.subr.mxu0 %v86
    %421 = vmatpush1.msra.mxu0 %v85
    %422 = vmatprep.subr.mxu0 %v96
    %423 = vmatpush1.msra.mxu0 %v95
    %424 = vmatprep.subr.mxu0 %v106
    %425 = vmatpush1.msra.mxu0 %v105
    %426 = vmatprep.subr.mxu0 %v116
    %427 = vmatpush1.msra.mxu0 %v115
    %428 = vmatprep.subr.mxu0 %v126
    %429 = vmatpush1.msra.mxu0 %v125
    %430 = vmatprep.subr.mxu0 %v136
    %431 = vmatpush1.msra.mxu0 %v135
    %432 = vmatprep.subr.mxu0 %v146
    %433 = vmatpush1.msra.mxu0 %v145
    %434 = vmatprep.subr.mxu0 %v156
    %435 = vmatpush1.msra.mxu0 %v155
    %436 = vmatprep.subr.mxu0 %v166
    %437 = vmatpush1.msra.mxu0 %v165
    %438 = vmatprep.subr.mxu0 %v176
    %439 = vmatpush1.msra.mxu0 %v175
    %440 = vmatprep.subr.mxu0 %v186
    %441 = vmatpush1.msra.mxu0 %v185
    %442 = vmatprep.subr.mxu0 %v196
    %443 = vmatpush1.msra.mxu0 %v195
    %444 = vmatprep.subr.mxu0 0.0
    %445 = vmatpush1.msra.mxu0 0.0
    %446 = vmatprep.subr.mxu0 0.0
    %447 = vmatpush1.msra.mxu0 0.0
    %448 = vmatprep.subr.mxu0 0.0
    %449 = vmatpush1.msra.mxu0 0.0
    %450 = vmatprep.subr.mxu0 0.0
    %451 = vmatpush1.msra.mxu0 0.0
    %452 = vmatprep.subr.mxu0 0.0
    %453 = vmatpush1.msra.mxu0 0.0
    %454 = vmatprep.subr.mxu0 0.0
    %455 = vmatpush1.msra.mxu0 0.0
    %456 = vmatprep.subr.mxu0 0.0
    %457 = vmatpush1.msra.mxu0 0.0
    %458 = vmatprep.subr.mxu0 0.0
    %459 = vmatpush1.msra.mxu0 0.0
    %460 = vmatprep.subr.mxu0 0.0
    %461 = vmatpush1.msra.mxu0 0.0
    %462 = vmatprep.subr.mxu0 0.0
    %463 = vmatpush1.msra.mxu0 0.0
    %464 = vmatprep.subr.mxu0 0.0
    %465 = vmatpush1.msra.mxu0 0.0
    %466 = vmatprep.subr.mxu0 0.0
    %467 = vmatpush1.msra.mxu0 0.0
    %468 = vmatprep.subr.mxu0 0.0
    %469 = vmatpush1.msra.mxu0 0.0
    %470 = vmatprep.subr.mxu0 0.0
    %471 = vmatpush1.msra.mxu0 0.0
    %472 = vmatprep.subr.mxu0 0.0
    %473 = vmatpush1.msra.mxu0 0.0
    %474 = vmatprep.subr.mxu0 0.0
    %475 = vmatpush1.msra.mxu0 0.0
    %476 = vmatprep.mubr.f32.mxu0 0.0
    %477 = vmatmul.mubr.f32.gmra.mrb[0].mxu0 %v38
    %v478 = vpop.f32.mrb[0].mxu0
    %v479 = vadd.f32 0.0, %v478
    %v480 = vpop.f32.mrb[0].mxu0
    %v481 = vadd.f32 0.0, %v480
    %482 = vdwg.mxu0
    %483 = vmatprep.subr.mxu0 %v48
    %484 = vmatpush1.msra.mxu0 %v47
    %485 = vmatprep.subr.mxu0 %v58
    %486 = vmatpush1.msra.mxu0 %v57
    %487 = vmatprep.subr.mxu0 %v68
    %488 = vmatpush1.msra.mxu0 %v67
    %489 = vmatprep.subr.mxu0 %v78
    %490 = vmatpush1.msra.mxu0 %v77
    %491 = vmatprep.subr.mxu0 %v88
    %492 = vmatpush1.msra.mxu0 %v87
    %493 = vmatprep.subr.mxu0 %v98
    %494 = vmatpush1.msra.mxu0 %v97
    %495 = vmatprep.subr.mxu0 %v108
    %496 = vmatpush1.msra.mxu0 %v107
    %497 = vmatprep.subr.mxu0 %v118
    %498 = vmatpush1.msra.mxu0 %v117
    %499 = vmatprep.subr.mxu0 %v128
    %500 = vmatpush1.msra.mxu0 %v127
    %501 = vmatprep.subr.mxu0 %v138
    %502 = vmatpush1.msra.mxu0 %v137
    %503 = vmatprep.subr.mxu0 %v148
    %504 = vmatpush1.msra.mxu0 %v147
    %505 = vmatprep.subr.mxu0 %v158
    %506 = vmatpush1.msra.mxu0 %v157
    %507 = vmatprep.subr.mxu0 %v168
    %508 = vmatpush1.msra.mxu0 %v167
    %509 = vmatprep.subr.mxu0 %v178
    %510 = vmatpush1.msra.mxu0 %v177
    %511 = vmatprep.subr.mxu0 %v188
    %512 = vmatpush1.msra.mxu0 %v187
    %513 = vmatprep.subr.mxu0 %v198
    %514 = vmatpush1.msra.mxu0 %v197
    %515 = vmatprep.subr.mxu0 0.0
    %516 = vmatpush1.msra.mxu0 0.0
    %517 = vmatprep.subr.mxu0 0.0
    %518 = vmatpush1.msra.mxu0 0.0
    %519 = vmatprep.subr.mxu0 0.0
    %520 = vmatpush1.msra.mxu0 0.0
    %521 = vmatprep.subr.mxu0 0.0
    %522 = vmatpush1.msra.mxu0 0.0
    %523 = vmatprep.subr.mxu0 0.0
    %524 = vmatpush1.msra.mxu0 0.0
    %525 = vmatprep.subr.mxu0 0.0
    %526 = vmatpush1.msra.mxu0 0.0
    %527 = vmatprep.subr.mxu0 0.0
    %528 = vmatpush1.msra.mxu0 0.0
    %529 = vmatprep.subr.mxu0 0.0
    %530 = vmatpush1.msra.mxu0 0.0
    %531 = vmatprep.subr.mxu0 0.0
    %532 = vmatpush1.msra.mxu0 0.0
    %533 = vmatprep.subr.mxu0 0.0
    %534 = vmatpush1.msra.mxu0 0.0
    %535 = vmatprep.subr.mxu0 0.0
    %536 = vmatpush1.msra.mxu0 0.0
    %537 = vmatprep.subr.mxu0 0.0
    %538 = vmatpush1.msra.mxu0 0.0
    %539 = vmatprep.subr.mxu0 0.0
    %540 = vmatpush1.msra.mxu0 0.0
    %541 = vmatprep.subr.mxu0 0.0
    %542 = vmatpush1.msra.mxu0 0.0
    %543 = vmatprep.subr.mxu0 0.0
    %544 = vmatpush1.msra.mxu0 0.0
    %545 = vmatprep.subr.mxu0 0.0
    %546 = vmatpush1.msra.mxu0 0.0
    %547 = vmatprep.mubr.f32.mxu0 0.0
    %548 = vmatmul.mubr.f32.gmra.mrb[0].mxu0 %v38
    %v549 = vpop.f32.mrb[0].mxu0
    %v550 = vadd.f32 0.0, %v549
    %v551 = vpop.f32.mrb[0].mxu0
    %v552 = vadd.f32 0.0, %v551
    %553 = vdwg.mxu0
    %554 = vst [vmem:[#allocation7] sm:$0xff] %v266
    %555 = vst [vmem:[#allocation7 + $0x8] sm:$0xff] %v268
    %556 = vst [vmem:[#allocation7 + $0x10] sm:$0xff] %v337
    %557 = vst [vmem:[#allocation7 + $0x18] sm:$0xff] %v339
    %558 = vst [vmem:[#allocation7 + $0x20] sm:$0xff] %v408
    %559 = vst [vmem:[#allocation7 + $0x28] sm:$0xff] %v410
    %560 = vst [vmem:[#allocation7 + $0x30] sm:$0xff] %v479
    %561 = vst [vmem:[#allocation7 + $0x38] sm:$0xff] %v481
    %562 = vst [vmem:[#allocation7 + $0x40] sm:$0xff] %v550
    %563 = vst [vmem:[#allocation7 + $0x48] sm:$0xff] %v552
    // Predicated region
    $region18: #{tpu_custom_call.1} parent=1 // pred_check
      _
    $region19: #{tpu_custom_call.1} parent=1 // pred_check_branch
      %565 = sbr.rel (0) target = $region21
    $region20: #{tpu_custom_call.1} parent=1 // pred_region
      %s567 = ssub.s32 1280, 1280
      %568 = vsyncadd [#allocation4], %s567
      %s570 = sshll.u32 [#allocation7], 4
      %s571 = int_to_ptr.vmem [resolvable:$true] %s570
      %573 = dma.vmem_to_hbm [thread:$0]  %s571, 1280, %s2, [#allocation4]
    $region21: #{tpu_custom_call.1} parent=1 // pred_fallthru
      _
    // Predicated region
    $region22: #{tpu_custom_call.1} parent=1 // pred_check
      _
    $region23: #{tpu_custom_call.1} parent=1 // pred_check_branch
      %575 = sbr.rel (0) target = $region25
    $region24: #{tpu_custom_call.1} parent=1 // pred_region
      %576 = dma.done [#allocation4], 1280
    $region25: #{tpu_custom_call.1} parent=1 // pred_fallthru
      _
    %577 = vsyncpa [#allocation3], 1
    %578 = vsyncpa [#allocation6], 1
    %579 = vsyncpa [#allocation4], 1

</llo_original>
